<compile_context>
chip_gen: v7x
topology: tpu7x:2x2x1
jax: 0.10.0
libtpu: 0.0.40
codegen_flags: <defaults>
</compile_context>

<pallas_src>
import functools
import math

import jax
import jax.numpy as jnp
from jax import lax
from jax.experimental import pallas as pl
from jax.experimental.pallas import tpu as pltpu

BN_EPS = 1e-3  # matches nn.BatchNorm1d(out_channels, eps=0.001)


def _round_up(v, m):
    return (v + m - 1) // m * m


def _divisor_tiles(dim_padded, max_tile):
    """Multiples of 128 that divide dim_padded, descending, capped at max_tile."""
    cap = min(dim_padded, _round_up(max_tile, 128))
    return [t for t in range(cap, 0, -128) if dim_padded % t == 0]


def _select_tiles(n_p, cin_p, cout_p, budget_bytes, mm_itemsize, tk_pref, tn_pref):
    """Pick (tk, tn) so the double-buffered per-step working set fits the VMEM budget.

    tn is maximized first (each extra Cout tile re-streams the full x from HBM), then
    tk (fewer grid steps, longer MXU accumulate chains).
    Returns (tk, tn, step_bytes).
    """
    def step_bytes(tk, tn):
        return (2 * n_p * tk * mm_itemsize      # x tile, double-buffered
                + 2 * tk * tn * mm_itemsize     # weight tile, double-buffered
                + 2 * 2 * tn * 4                # packed gamma/beta, double-buffered
                + 2 * n_p * tn * 4)             # f32 output (doubles as accumulator)

    tn_cands = _divisor_tiles(cout_p, tn_pref)
    tk_cands = _divisor_tiles(cin_p, tk_pref)
    for tn in tn_cands:
        for tk in tk_cands:
            b = step_bytes(tk, tn)
            if b <= budget_bytes:
                return tk, tn, b
    # TODO(synk): add a two-pass (N-tiled) BatchNorm fallback (pass 1: per-channel
    # sum/sumsq across N tiles; pass 2: scale/shift + ReLU) for very large batches.
    raise ValueError(
        "Batch too large for the single-pass (full batch resident) BN kernel: "
        f"minimum working set {step_bytes(tk_cands[-1], tn_cands[-1])} B exceeds the "
        f"VMEM budget {budget_bytes} B.")


def _basic_fc_kernel(x_ref, w_ref, gb_ref, o_ref, *, n_real, n_padded):
    k = pl.program_id(1)

    @pl.when(k == 0)
    def _init():
        o_ref[...] = jnp.zeros_like(o_ref)

    # x tile: (Np, tk); w tile (pre-transposed): (tk, tn). Plain contraction -> MXU.
    o_ref[...] += jnp.dot(x_ref[...], w_ref[...],
                          preferred_element_type=jnp.float32)

    @pl.when(k == pl.num_programs(1) - 1)
    def _finalize():
        y = o_ref[...]                                 # (Np, tn) f32 Linear(no-bias)
        inv_n = 1.0 / float(n_real)
        # Padded batch rows are exactly zero (zero x rows, no bias), so the column sum
        # over all Np rows equals the sum over the real N rows.
        mean = jnp.sum(y, axis=0, keepdims=True) * inv_n
        c = y - mean
        ss = jnp.sum(c * c, axis=0, keepdims=True)
        if n_padded > n_real:
            # Each of the (Np - N) zero rows contributed (0 - mean)^2 = mean^2.
            ss = ss - float(n_padded - n_real) * (mean * mean)
        var = ss * inv_n

        # Folded BN affine: 2 VALU ops per element; rsqrt goes to the EUP slot.
        scale = gb_ref[0:1, :] * lax.rsqrt(var + BN_EPS)
        shift = gb_ref[1:2, :] - mean * scale
        o_ref[...] = jnp.maximum(y * scale + shift, 0.0)


def basic_fc(x, weight, bias, gamma, beta, *,
             tk_pref=1024, tn_pref=2048, matmul_dtype=jnp.bfloat16):
    """x: (N, Cin); weight: (Cout, Cin); bias/gamma/beta: (Cout,). Returns (N, Cout) f32.

    Note: the Linear bias is mathematically cancelled by training-mode BatchNorm
    (y - mean(y) is invariant to a per-channel constant and var is unchanged), so it
    is not fed to the kernel. Pass matmul_dtype=jnp.float32 for an f32-exact matmul.
    """
    del bias  # cancelled exactly by the batch-statistics normalization
    n, cin = x.shape
    cout, cin_w = weight.shape
    assert cin == cin_w

    # Lane/sublane-dense padded shapes.
    n_p = _round_up(n, 8)
    cin_p = _round_up(cin, 128)
    cout_p = _round_up(cout, 128)

    mm_itemsize = jnp.dtype(matmul_dtype).itemsize

    # Per-generation VMEM budget (per TensorCore: 64 MiB on v7x, 128 MiB on v5e/v6e).
    try:
        vmem_cap = int(pltpu.get_tpu_info().vmem_capacity_bytes)
    except Exception:
        vmem_cap = 64 * 1024 * 1024  # conservative fallback (v7x per-TC)
    budget = int(0.85 * vmem_cap)    # leave headroom for compiler scratch / DMA windows

    tk, tn, step_bytes = _select_tiles(
        n_p, cin_p, cout_p, budget, mm_itemsize, tk_pref, tn_pref)
    vmem_limit = int(min(budget, max(2 * step_bytes, 16 * 1024 * 1024)))

    # Zero-pad (zeros keep the matmul exact; padded out-columns are sliced away).
    # Weight is transposed to (Cin_p, Cout_p) here -- fused with the pad by XLA -- so
    # the kernel never transposes a tile on the XLU.
    x_p = jnp.zeros((n_p, cin_p), matmul_dtype).at[:n, :cin].set(x.astype(matmul_dtype))
    w_p = jnp.zeros((cin_p, cout_p), matmul_dtype).at[:cin, :cout].set(
        weight.T.astype(matmul_dtype))
    gb_p = (jnp.zeros((2, cout_p), jnp.float32)
            .at[0, :cout].set(gamma.astype(jnp.float32))
            .at[1, :cout].set(beta.astype(jnp.float32)))

    grid = (cout_p // tn, cin_p // tk)
    kernel = functools.partial(_basic_fc_kernel, n_real=n, n_padded=n_p)

    # Triple-buffer the weight stream when each matmul step is short (small N) and the
    # K chain is long enough that the tn*tk weight DMA may be exposed.
    k_steps = cin_p // tk
    if n_p <= 256 and k_steps >= 4:
        w_spec = pl.BlockSpec((tk, tn), lambda j, k: (k, j),
                              pipeline_mode=pl.Buffered(3))
    else:
        w_spec = pl.BlockSpec((tk, tn), lambda j, k: (k, j))

    # x is re-streamed from HBM once per Cout tile (its block index changes at every
    # j boundary); account for that in the cost estimate.
    x_rereads = cout_p // tn
    cost = pl.CostEstimate(
        flops=2 * n_p * cin_p * cout_p,
        transcendentals=cout_p,
        bytes_accessed=(x_rereads * n_p * cin_p * mm_itemsize     # x (re-)reads
                        + cout_p * cin_p * mm_itemsize            # weight, once
                        + 2 * cout_p * 4                          # gamma/beta
                        + n_p * cout_p * 4),                      # output write
    )

    out_p = pl.pallas_call(
        kernel,
        out_shape=jax.ShapeDtypeStruct((n_p, cout_p), jnp.float32),
        grid_spec=pltpu.PrefetchScalarGridSpec(
            num_scalar_prefetch=0,
            grid=grid,
            in_specs=[
                pl.BlockSpec((n_p, tk), lambda j, k: (0, k)),   # x
                w_spec,                                         # weight^T (Cin, Cout)
                pl.BlockSpec((2, tn), lambda j, k: (0, j)),     # packed gamma/beta
            ],
            out_specs=pl.BlockSpec((n_p, tn), lambda j, k: (0, j)),
            scratch_shapes=[],
        ),
        compiler_params=pltpu.CompilerParams(
            dimension_semantics=("parallel", "arbitrary"),
            vmem_limit_bytes=vmem_limit,
        ),
        cost_estimate=cost,
    )(x_p, w_p, gb_p)

    return out_p[:n, :cout]


def init_params(key, in_channels, out_channels):
    # nn.Linear default init: U(-1/sqrt(fan_in), 1/sqrt(fan_in)) for weight and bias.
    kw, kb = jax.random.split(key)
    bound = 1.0 / math.sqrt(in_channels)
    weight = jax.random.uniform(
        kw, (out_channels, in_channels), jnp.float32, minval=-bound, maxval=bound)
    bias = jax.random.uniform(
        kb, (out_channels,), jnp.float32, minval=-bound, maxval=bound)
    gamma = jnp.ones((out_channels,), jnp.float32)   # BatchNorm1d affine defaults
    beta = jnp.zeros((out_channels,), jnp.float32)
    return weight, bias, gamma, beta


def reference(x, weight, bias, gamma, beta, matmul_dtype=None):
    if matmul_dtype is not None:
        y = jnp.dot(x.astype(matmul_dtype), weight.astype(matmul_dtype).T,
                    preferred_element_type=jnp.float32) + bias
    else:
        y = x @ weight.T + bias
    mean = jnp.mean(y, axis=0, keepdims=True)
    var = jnp.mean((y - mean) ** 2, axis=0, keepdims=True)
    y_hat = (y - mean) / jnp.sqrt(var + BN_EPS)
    return jnp.maximum(y_hat * gamma + beta, 0.0)


# TODO(synk): BatchNorm1d running_mean/running_var buffer updates (training-mode side
# effect) are not emitted; they do not affect the forward output.

if __name__ == "__main__":
    key = jax.random.PRNGKey(0)
    kx, kp = jax.random.split(key)

    N, C_IN, C_OUT = 8, 32, 16
    x = jax.random.normal(kx, (N, C_IN), jnp.float32)
    weight, bias, gamma, beta = init_params(kp, C_IN, C_OUT)

    out = jax.block_until_ready(basic_fc(x, weight, bias, gamma, beta))
    assert out.shape == (N, C_OUT)

    # Tight check vs a reference that uses the same bf16 matmul precision.
    ref_bf16 = reference(x, weight, bias, gamma, beta, matmul_dtype=jnp.bfloat16)
    assert jnp.allclose(out, ref_bf16, atol=2e-3, rtol=2e-3), "mismatch vs bf16 reference"

    # Loose check vs the exact f32 PyTorch-semantics reference.
    ref_f32 = reference(x, weight, bias, gamma, beta)
    assert jnp.allclose(out, ref_f32, atol=5e-2, rtol=5e-2), "mismatch vs f32 reference"

    print("KERNEL_OK")
</pallas_src>

<mosaic_0001>
module attributes {stable_mosaic.version = 11 : i64} {
  func.func @_basic_fc_kernel(%arg0: i32, %arg1: i32, %arg2: memref<8x128xbf16, #tpu.memory_space<vmem>>, %arg3: memref<128x128xbf16, #tpu.memory_space<vmem>>, %arg4: memref<2x128xf32, #tpu.memory_space<vmem>>, %arg5: memref<8x128xf32, #tpu.memory_space<vmem>>) attributes {dimension_semantics = [#tpu.dimension_semantics<parallel>, #tpu.dimension_semantics<arbitrary>], iteration_bounds = array<i64: 1, 1>, scalar_prefetch = 0 : i64, scratch_operands = 0 : i64, tpu.core_type = #tpu.core_type<tc>, window_params = [{transform_indices = @transform_0, window_bounds = array<i64: 8, 128>}, {transform_indices = @transform_1, window_bounds = array<i64: 128, 128>}, {transform_indices = @transform_2, window_bounds = array<i64: 2, 128>}, {transform_indices = @transform_3, window_bounds = array<i64: 8, 128>}]} {
    %c0_i32 = arith.constant 0 : i32
    %0 = arith.cmpi eq, %arg1, %c0_i32 : i32
    %1 = arith.extui %0 : i1 to i32
    %c0_i32_0 = arith.constant 0 : i32
    %2 = arith.cmpi ne, %1, %c0_i32_0 : i32
    scf.if %2 {
      %cst_10 = arith.constant 0.000000e+00 : f32
      %12 = vector.broadcast %cst_10 : f32 to vector<8x128xf32>
      %c0_11 = arith.constant 0 : index
      %c0_12 = arith.constant 0 : index
      %13 = vector.load %arg5[%c0_11, %c0_12] : memref<8x128xf32, #tpu.memory_space<vmem>>, vector<8x128xf32>
      tpu.vector_store %arg5[%c0_11, %c0_12], %12 {strides = array<i32>} : memref<8x128xf32, #tpu.memory_space<vmem>>, vector<8x128xf32>,
    } else {
    }
    %c0 = arith.constant 0 : index
    %c0_1 = arith.constant 0 : index
    %3 = vector.load %arg5[%c0, %c0_1] : memref<8x128xf32, #tpu.memory_space<vmem>>, vector<8x128xf32>
    %c0_2 = arith.constant 0 : index
    %c0_3 = arith.constant 0 : index
    %4 = vector.load %arg2[%c0_2, %c0_3] : memref<8x128xbf16, #tpu.memory_space<vmem>>, vector<8x128xbf16>
    %c0_4 = arith.constant 0 : index
    %c0_5 = arith.constant 0 : index
    %5 = vector.load %arg3[%c0_4, %c0_5] : memref<128x128xbf16, #tpu.memory_space<vmem>>, vector<128x128xbf16>
    %cst = arith.constant dense<0.000000e+00> : vector<8x128xf32>
    %6 = tpu.matmul %4, %5, %cst {dimension_numbers = #tpu.dot_dimension_numbers<[1], [0], [0], [1], [0, 0, 1, 1], [], []>} : vector<8x128xbf16>, vector<128x128xbf16>, vector<8x128xf32> -> vector<8x128xf32>
    %7 = arith.addf %3, %6 : vector<8x128xf32>
    %c0_6 = arith.constant 0 : index
    %c0_7 = arith.constant 0 : index
    %8 = vector.load %arg5[%c0_6, %c0_7] : memref<8x128xf32, #tpu.memory_space<vmem>>, vector<8x128xf32>
    tpu.vector_store %arg5[%c0_6, %c0_7], %7 {strides = array<i32>} : memref<8x128xf32, #tpu.memory_space<vmem>>, vector<8x128xf32>,
    %c0_i32_8 = arith.constant 0 : i32
    %9 = arith.cmpi eq, %arg1, %c0_i32_8 : i32
    %10 = arith.extui %9 : i1 to i32
    %c0_i32_9 = arith.constant 0 : i32
    %11 = arith.cmpi ne, %10, %c0_i32_9 : i32
    scf.if %11 {
      %c0_10 = arith.constant 0 : index
      %c0_11 = arith.constant 0 : index
      %12 = vector.load %arg5[%c0_10, %c0_11] : memref<8x128xf32, #tpu.memory_space<vmem>>, vector<8x128xf32>
      %cst_12 = arith.constant dense<0.000000e+00> : vector<128xf32>
      %13 = vector.multi_reduction <add>, %12, %cst_12 [0] : vector<8x128xf32> to vector<128xf32>
      %14 = vector.shape_cast %13 : vector<128xf32> to vector<1x128xf32>
      %cst_13 = arith.constant 1.250000e-01 : f32
      %15 = vector.broadcast %cst_13 : f32 to vector<1x128xf32>
      %16 = arith.mulf %14, %15 : vector<1x128xf32>
      %17 = vector.broadcast %16 : vector<1x128xf32> to vector<8x128xf32>
      %18 = arith.subf %12, %17 : vector<8x128xf32>
      %19 = arith.mulf %18, %18 : vector<8x128xf32>
      %cst_14 = arith.constant dense<0.000000e+00> : vector<128xf32>
      %20 = vector.multi_reduction <add>, %19, %cst_14 [0] : vector<8x128xf32> to vector<128xf32>
      %21 = vector.shape_cast %20 : vector<128xf32> to vector<1x128xf32>
      %cst_15 = arith.constant 1.250000e-01 : f32
      %22 = vector.broadcast %cst_15 : f32 to vector<1x128xf32>
      %23 = arith.mulf %21, %22 : vector<1x128xf32>
      %c0_16 = arith.constant 0 : index
      %c0_17 = arith.constant 0 : index
      %24 = vector.load %arg4[%c0_16, %c0_17] : memref<2x128xf32, #tpu.memory_space<vmem>>, vector<1x128xf32>
      %cst_18 = arith.constant 1.000000e-03 : f32
      %25 = vector.broadcast %cst_18 : f32 to vector<1x128xf32>
      %26 = arith.addf %23, %25 : vector<1x128xf32>
      %27 = math.rsqrt %26 : vector<1x128xf32>
      %28 = arith.mulf %24, %27 : vector<1x128xf32>
      %c1 = arith.constant 1 : index
      %c0_19 = arith.constant 0 : index
      %29 = vector.load %arg4[%c1, %c0_19] : memref<2x128xf32, #tpu.memory_space<vmem>>, vector<1x128xf32>
      %30 = arith.mulf %16, %28 : vector<1x128xf32>
      %31 = arith.subf %29, %30 : vector<1x128xf32>
      %32 = vector.broadcast %28 : vector<1x128xf32> to vector<8x128xf32>
      %33 = arith.mulf %12, %32 : vector<8x128xf32>
      %34 = vector.broadcast %31 : vector<1x128xf32> to vector<8x128xf32>
      %35 = arith.addf %33, %34 : vector<8x128xf32>
      %cst_20 = arith.constant 0.000000e+00 : f32
      %36 = vector.broadcast %cst_20 : f32 to vector<8x128xf32>
      %37 = arith.maximumf %35, %36 : vector<8x128xf32>
      %c0_21 = arith.constant 0 : index
      %c0_22 = arith.constant 0 : index
      %38 = vector.load %arg5[%c0_21, %c0_22] : memref<8x128xf32, #tpu.memory_space<vmem>>, vector<8x128xf32>
      tpu.vector_store %arg5[%c0_21, %c0_22], %37 {strides = array<i32>} : memref<8x128xf32, #tpu.memory_space<vmem>>, vector<8x128xf32>,
    } else {
    }
    return
  }
  func.func @transform_0(%arg0: i32, %arg1: i32) -> (i32, i32) {
    %c0_i32 = arith.constant 0 : i32
    %c0_i32_0 = arith.constant 0 : i32
    return %c0_i32, %arg1 : i32, i32
  }
  func.func @transform_1(%arg0: i32, %arg1: i32) -> (i32, i32) {
    %c0_i32 = arith.constant 0 : i32
    return %arg1, %arg0 : i32, i32
  }
  func.func @transform_2(%arg0: i32, %arg1: i32) -> (i32, i32) {
    %c0_i32 = arith.constant 0 : i32
    %c0_i32_0 = arith.constant 0 : i32
    return %c0_i32, %arg0 : i32, i32
  }
  func.func @transform_3(%arg0: i32, %arg1: i32) -> (i32, i32) {
    %c0_i32 = arith.constant 0 : i32
    %c0_i32_0 = arith.constant 0 : i32
    return %c0_i32, %arg0 : i32, i32
  }
}

</mosaic_0001>

<llo_original>
// kernel: tpu_custom_call.1
$region0: #{tpu_custom_call.1}
  #allocation0 [shape = 'u32[]', space=smem, size = 0x4, offset = 0x4, fixed_abs, tag = 'smem constant byte address 0x4 - core index']
  #allocation1 [shape = 'u32[144,128]{1,0:T(1,128)}', space=vmem, size = 0x12000, scoped, tag = 'internal scratch']
  %s0 = inlined_call_operand.hbm [shape: bf16[8,128], index: 0, kind: input, shape index: {}]
  %s1 = inlined_call_operand.hbm [shape: bf16[128,128], index: 1, kind: input, shape index: {}]
  %s2 = inlined_call_operand.vmem [shape: f32[2,128], index: 2, kind: input, shape index: {}]
  %s3 = inlined_call_operand.hbm [shape: f32[8,128], index: 3, kind: output, shape index: {}]
  %s4 = sld [smem:[#allocation0]]
  $region38: #{tpu_custom_call.1} parent=0
    _
  %s6 = ssub.s32 1, %s4
  %s7 = scalar_select 0, %s6, %s4
  $region1: #{tpu_custom_call.1} parent=0
    #allocation2 [shape = 'u8[2048]{0}', space=vmem, size = 0x800, scoped, tag = 'input window, operand 0, single buffered']
    #allocation3 [shape = 's32[1]{0}', space=sflag, size = 0x4, scoped, tag = 'scoped memory for tpu_custom_call.1']
    #allocation4 [shape = 's32[1]{0}', space=sflag, size = 0x4, scoped, tag = 'scoped memory for tpu_custom_call.1']
    #allocation5 [shape = 'u8[32768]{0}', space=vmem, size = 0x8000, scoped, tag = 'input window, operand 1, single buffered']
    #allocation6 [shape = 's32[1]{0}', space=sflag, size = 0x4, scoped, tag = 'scoped memory for tpu_custom_call.1']
    #allocation7 [shape = 'u8[4096]{0}', space=vmem, size = 0x1000, scoped, tag = 'output window, operand 0, single buffered']
    %8 = vsyncpa [#allocation3], 0
    %9 = vsyncpa [#allocation6], 0
    %10 = vsyncpa [#allocation4], 0
    // Predicated region
    $region2: #{tpu_custom_call.1} parent=1 // pred_check
      _
    $region3: #{tpu_custom_call.1} parent=1 // pred_check_branch
      %12 = sbr.rel (0) target = $region5
    $region4: #{tpu_custom_call.1} parent=1 // pred_region
      %s14 = ssub.s32 64, 64
      %15 = vsyncadd [#allocation3], %s14
      %s17 = sshll.u32 [#allocation2], 4
      %s18 = int_to_ptr.vmem [resolvable:$true] %s17
      %20 = dma.hbm_to_vmem [thread:$0]  %s0, 64, %s18, [#allocation3]
    $region5: #{tpu_custom_call.1} parent=1 // pred_fallthru
      _
    // Predicated region
    $region6: #{tpu_custom_call.1} parent=1 // pred_check
      _
    $region7: #{tpu_custom_call.1} parent=1 // pred_check_branch
      %22 = sbr.rel (0) target = $region9
    $region8: #{tpu_custom_call.1} parent=1 // pred_region
      %s24 = ssub.s32 1024, 1024
      %25 = vsyncadd [#allocation6], %s24
      %s26 = sshll.u32 [#allocation5], 4
      %s27 = int_to_ptr.vmem [resolvable:$true] %s26
      %32 = dma.hbm_to_vmem [thread:$0]  %s1, 1024, %s27, [#allocation6], 64, 64, 4
    $region9: #{tpu_custom_call.1} parent=1 // pred_fallthru
      _
    // Predicated region
    $region10: #{tpu_custom_call.1} parent=1 // pred_check
      _
    $region11: #{tpu_custom_call.1} parent=1 // pred_check_branch
      %34 = sbr.rel (0) target = $region13
    $region12: #{tpu_custom_call.1} parent=1 // pred_region
      _
    $region13: #{tpu_custom_call.1} parent=1 // pred_fallthru
      _
    // Predicated region
    $region14: #{tpu_custom_call.1} parent=1 // pred_check
      _
    $region15: #{tpu_custom_call.1} parent=1 // pred_check_branch
      %36 = sbr.rel (0) target = $region17
    $region16: #{tpu_custom_call.1} parent=1 // pred_region
      %37 = dma.done [#allocation3], 64
    $region17: #{tpu_custom_call.1} parent=1 // pred_fallthru
      _
    // Predicated region
    $region18: #{tpu_custom_call.1} parent=1 // pred_check
      _
    $region19: #{tpu_custom_call.1} parent=1 // pred_check_branch
      %39 = sbr.rel (0) target = $region21
    $region20: #{tpu_custom_call.1} parent=1 // pred_region
      %40 = dma.done [#allocation6], 1024
    $region21: #{tpu_custom_call.1} parent=1 // pred_fallthru
      _
    %p42 = scmp.eq.s32.totalorder 0, 0
    // Predicated region
    $region22: #{tpu_custom_call.1} parent=1 // pred_check
      %p43 = pneg %p42
    $region23: #{tpu_custom_call.1} parent=1 // pred_check_branch
      %45 = sbr.rel (%p43) target = $region25
    $region24: #{tpu_custom_call.1} parent=1 // pred_region
      %46 = vst [vmem:[#allocation7] sm:$0xff] 0.0
    $region25: #{tpu_custom_call.1} parent=1 // pred_fallthru
      _
    %v47 = vld [vmem:[#allocation7] sm:$0xff]
    %v48 = vld [vmem:[#allocation2] sm:$0xf]
    %v49 = vld [vmem:[#allocation5] sm:$0xf]
    %v50 = vld [vmem:[#allocation5 + $0x4] sm:$0xf]
    %v51 = vld [vmem:[#allocation5 + $0x8] sm:$0xf]
    %v52 = vld [vmem:[#allocation5 + $0xc] sm:$0xf]
    %v53 = vld [vmem:[#allocation5 + $0x10] sm:$0xf]
    %v54 = vld [vmem:[#allocation5 + $0x14] sm:$0xf]
    %v55 = vld [vmem:[#allocation5 + $0x18] sm:$0xf]
    %v56 = vld [vmem:[#allocation5 + $0x1c] sm:$0xf]
    %v57 = vld [vmem:[#allocation5 + $0x20] sm:$0xf]
    %v58 = vld [vmem:[#allocation5 + $0x24] sm:$0xf]
    %v59 = vld [vmem:[#allocation5 + $0x28] sm:$0xf]
    %v60 = vld [vmem:[#allocation5 + $0x2c] sm:$0xf]
    %v61 = vld [vmem:[#allocation5 + $0x30] sm:$0xf]
    %v62 = vld [vmem:[#allocation5 + $0x34] sm:$0xf]
    %v63 = vld [vmem:[#allocation5 + $0x38] sm:$0xf]
    %v64 = vld [vmem:[#allocation5 + $0x3c] sm:$0xf]
    %v81 = vunpack.c.l.b16 %v49
    %v82 = vunpack.c.l.b16 %v50
    %v83 = vunpack.c.l.b16 %v51
    %v84 = vunpack.c.l.b16 %v52
    %v85 = vunpack.c.l.b16 %v53
    %v86 = vunpack.c.l.b16 %v54
    %v87 = vunpack.c.l.b16 %v55
    %v88 = vunpack.c.l.b16 %v56
    %v89 = vunpack.c.l.b16 %v57
    %v90 = vunpack.c.l.b16 %v58
    %v91 = vunpack.c.l.b16 %v59
    %v92 = vunpack.c.l.b16 %v60
    %v93 = vunpack.c.l.b16 %v61
    %v94 = vunpack.c.l.b16 %v62
    %v95 = vunpack.c.l.b16 %v63
    %v96 = vunpack.c.l.b16 %v64
    %v97 = vpack.c.b16 %v82, %v81
    %v98 = vpack.c.b16 %v84, %v83
    %v99 = vpack.c.b16 %v86, %v85
    %v100 = vpack.c.b16 %v88, %v87
    %v101 = vpack.c.b16 %v90, %v89
    %v102 = vpack.c.b16 %v92, %v91
    %v103 = vpack.c.b16 %v94, %v93
    %v104 = vpack.c.b16 %v96, %v95
    %113 = vmatprep.subr.bf16.mxu0 0
    %114 = vmatpush1.bf16.msra.mxu0 %v97
    %115 = vmatprep.subr.bf16.mxu0 0
    %116 = vmatpush1.bf16.msra.mxu0 %v98
    %117 = vmatprep.subr.bf16.mxu0 0
    %118 = vmatpush1.bf16.msra.mxu0 %v99
    %119 = vmatprep.subr.bf16.mxu0 0
    %120 = vmatpush1.bf16.msra.mxu0 %v100
    %121 = vmatprep.subr.bf16.mxu0 0
    %122 = vmatpush1.bf16.msra.mxu0 %v101
    %123 = vmatprep.subr.bf16.mxu0 0
    %124 = vmatpush1.bf16.msra.mxu0 %v102
    %125 = vmatprep.subr.bf16.mxu0 0
    %126 = vmatpush1.bf16.msra.mxu0 %v103
    %127 = vmatprep.subr.bf16.mxu0 0
    %128 = vmatpush1.bf16.msra.mxu0 %v104
    %129 = vmatprep.subr.bf16.mxu0 0
    %130 = vmatpush1.bf16.msra.mxu0 0
    %131 = vmatprep.subr.bf16.mxu0 0
    %132 = vmatpush1.bf16.msra.mxu0 0
    %133 = vmatprep.subr.bf16.mxu0 0
    %134 = vmatpush1.bf16.msra.mxu0 0
    %135 = vmatprep.subr.bf16.mxu0 0
    %136 = vmatpush1.bf16.msra.mxu0 0
    %137 = vmatprep.subr.bf16.mxu0 0
    %138 = vmatpush1.bf16.msra.mxu0 0
    %139 = vmatprep.subr.bf16.mxu0 0
    %140 = vmatpush1.bf16.msra.mxu0 0
    %141 = vmatprep.subr.bf16.mxu0 0
    %142 = vmatpush1.bf16.msra.mxu0 0
    %143 = vmatprep.subr.bf16.mxu0 0
    %144 = vmatpush1.bf16.msra.mxu0 0
    %145 = vmatprep.mubr.bf16.mxu0 0
    %146 = vmatmul.mubr.bf16.gmra.mrb[0].mxu0 %v48
    %v147 = vpop.f32.mrb[0].mxu0
    %v148 = vadd.f32 0.0, %v147
    %v149 = vpop.f32.mrb[0].mxu0
    %v150 = vpop.f32.mrb[0].mxu0
    %v151 = vpop.f32.mrb[0].mxu0
    %152 = vdwg.mxu0
    %v153 = vadd.f32 %v47, %v148
    %154 = vst [vmem:[#allocation7] sm:$0xff] %v153
    // Predicated region
    $region26: #{tpu_custom_call.1} parent=1 // pred_check
      %p155 = pneg %p42
    $region27: #{tpu_custom_call.1} parent=1 // pred_check_branch
      %157 = sbr.rel (%p155) target = $region29
    $region28: #{tpu_custom_call.1} parent=1 // pred_region
      %v158 = vld [vmem:[#allocation7] sm:$0xff]
      %v159 = vrot.slane %v158, 4
      %v160 = vadd.f32 %v158, %v159
      %v161 = vrot.slane %v160, 2
      %v162 = vadd.f32 %v160, %v161
      %v163 = vrot.slane %v162, 1
      %v164 = vadd.f32 %v162, %v163
      %v165 = vmul.f32 %v164, 0.125
      %v166 = vsub.f32 %v158, %v165
      %v167 = vmul.f32 %v166, %v166
      %v168 = vrot.slane %v167, 4
      %v169 = vadd.f32 %v167, %v168
      %v170 = vrot.slane %v169, 2
      %v171 = vadd.f32 %v169, %v170
      %v172 = vrot.slane %v171, 1
      %v173 = vadd.f32 %v171, %v172
      %v174 = vmul.f32 %v173, 0.125
      %v175 = vld [vmem:[%s2] sm:$0x1]
      %v176 = vadd.f32 %v174, 0.001
      %v177 = vrsqrt.pop %v176
      %v178 = vmul.f32 %v175, %v177
      %v179 = vld [vmem:[%s2 + $0x1] sm:$0x1]
      %v180 = vmul.f32 %v165, %v178
      %v181 = vsub.f32 %v179, %v180
      %v182 = vlaneseq
      %v183 = vshrl.u32 %v182, 7
      %v184 = vsub.s32 0, %v183
      %v185 = vrot.slane %v178, %v184
      %v186 = vmul.f32 %v158, %v185
      %v187 = vlaneseq
      %v188 = vshrl.u32 %v187, 7
      %v189 = vsub.s32 0, %v188
      %v190 = vrot.slane %v181, %v189
      %v191 = vadd.f32 %v186, %v190
      %v192 = vmax.f32 %v191, 0.0
      %193 = vst [vmem:[#allocation7] sm:$0xff] %v192
    $region29: #{tpu_custom_call.1} parent=1 // pred_fallthru
      _
    // Predicated region
    $region30: #{tpu_custom_call.1} parent=1 // pred_check
      _
    $region31: #{tpu_custom_call.1} parent=1 // pred_check_branch
      %195 = sbr.rel (0) target = $region33
    $region32: #{tpu_custom_call.1} parent=1 // pred_region
      %s197 = ssub.s32 128, 128
      %198 = vsyncadd [#allocation4], %s197
      %s200 = sshll.u32 [#allocation7], 4
      %s201 = int_to_ptr.vmem [resolvable:$true] %s200
      %203 = dma.vmem_to_hbm [thread:$0]  %s201, 128, %s3, [#allocation4]
    $region33: #{tpu_custom_call.1} parent=1 // pred_fallthru
      _
    // Predicated region
    $region34: #{tpu_custom_call.1} parent=1 // pred_check
      _
    $region35: #{tpu_custom_call.1} parent=1 // pred_check_branch
      %205 = sbr.rel (0) target = $region37
    $region36: #{tpu_custom_call.1} parent=1 // pred_region
      %206 = dma.done [#allocation4], 128
    $region37: #{tpu_custom_call.1} parent=1 // pred_fallthru
      _
    %207 = vsyncpa [#allocation3], 1
    %208 = vsyncpa [#allocation6], 1
    %209 = vsyncpa [#allocation4], 1

</llo_original>
